<compile_context>
chip_gen: v7x
topology: tpu7x:2x2x1
jax: 0.10.0
libtpu: 0.0.40
codegen_flags: <defaults>
</compile_context>

<pallas_src>
import functools
import math

import jax
import jax.numpy as jnp
from jax import lax
from jax.experimental import pallas as pl
from jax.experimental.pallas import tpu as pltpu


# ------------------------------ kernel body --------------------------------

def _merge_reduce_norm_kernel(x_ref, w_h0_ref, w_h1_ref, g_ref, b_ref, o_ref,
                              *, eps: float, inv_d: float):
    """Fused 2x2 merge + Linear(4C->2C, no bias) + LayerNorm(2Cout, eps).

    x_ref:   (tr, 2, Wo, 2C)   fused tile; dim 1 = h-parity, the 2C lanes of a
                               merged token are [w-even C | w-odd C].
    w_h0/1:  (2C, 2Cout)       row-permuted halves of the reduction weight.
    g/b:     (1, 2Cout)        LayerNorm affine params (f32).
    o_ref:   (tr*Wo, 2Cout)    flat (token, channel) output tile, lane-dense.
    """
    tr, _, wo, c2 = x_ref.shape
    nt, _ = o_ref.shape  # nt == tr * wo by construction

    # Per-parity token slabs.  The (tr, Wo) -> (tr*Wo) collapse is a free view
    # when Wo is a multiple of the sublane packing; otherwise Mosaic emits an
    # in-VMEM repack that overlaps the next tile's DMA (kernel is HBM-bound).
    a0 = x_ref[:, 0, :, :].reshape(nt, c2)   # h-even rows -> [x0 | x2]
    a1 = x_ref[:, 1, :, :].reshape(nt, c2)   # h-odd  rows -> [x1 | x3]

    # Linear(4C -> 2C) as the sum of the two h-parity partial products.
    # Operands stay in the model dtype; accumulation is f32 on the MXU
    # (on v7x the second dot can accumulate in place in the MRB).
    y = jnp.dot(a0, w_h0_ref[...], preferred_element_type=jnp.float32)
    y = y + jnp.dot(a1, w_h1_ref[...], preferred_element_type=jnp.float32)

    # LayerNorm in f32: sum * (1/d) instead of mean (compile-time reciprocal),
    # rsqrt goes to the EUP slot.
    mean = jnp.sum(y, axis=-1, keepdims=True) * inv_d
    centered = y - mean
    var = jnp.sum(centered * centered, axis=-1, keepdims=True) * inv_d
    out = centered * lax.rsqrt(var + eps) * g_ref[...] + b_ref[...]

    o_ref[...] = out.astype(o_ref.dtype)


# --------------------------- tiling / VMEM sizing ---------------------------

def _pick_vmem_limit() -> int:
    """~3/4 of physical per-core VMEM, capped at 96 MiB (v5e/v6e), ~48 MiB on v7x."""
    try:
        cap = int(getattr(pltpu.get_tpu_info(), "vmem_capacity_bytes",
                          64 * 1024 * 1024))
    except Exception:  # query unavailable: assume the smallest generation (v7x)
        cap = 64 * 1024 * 1024
    return max(32 * 1024 * 1024, min((cap * 3) // 4, 96 * 1024 * 1024))


def _pick_row_tile(R: int, Wo: int, C: int, itemsize: int,
                   target_tokens: int, vmem_limit: int) -> int:
    c2 = 2 * C
    # Resident operands: two weight halves (single-buffered via Buffered(1),
    # budgeted at 2 buffers as a safety margin) + LN params + scratch headroom.
    resident = 2 * (2 * c2 * c2 * itemsize) + 2 * (2 * c2 * 4)
    act_budget = max(1 << 20, vmem_limit - resident - 2 * 1024 * 1024)

    # Per merged token: fused input (4C) and output (2C) double-buffered,
    # worst-case per-parity repack copies, ~5 f32-wide matmul/LN temporaries.
    per_token = (2 * (4 * C) * itemsize + 2 * c2 * itemsize
                 + 2 * c2 * itemsize + 5 * c2 * 4)

    min_grid_steps = 8                 # >= 3-4 pipelined steps per TC (2 TCs on v7x)
    tr_tok = max(1, target_tokens // Wo)
    tr_grid = max(1, pl.cdiv(R, min_grid_steps))
    tr_vmem = max(1, (act_budget // per_token) // Wo)
    tr = min(tr_tok, tr_grid, tr_vmem)

    # Keep the flat output block sublane-aligned: (tr*Wo) % (8 * packing) == 0.
    packing = max(1, 4 // itemsize)
    sub = 8 * packing
    step = sub // math.gcd(Wo, sub)
    tr = max(step, (tr // step) * step)
    if tr >= R:
        tr = R                         # single full block (tiny inputs)
    return tr


# ------------------------------- entry point --------------------------------

def patch_merging_forward(
    x: jax.Array,
    w: jax.Array,
    gamma: jax.Array,
    beta: jax.Array,
    *,
    eps: float = 1e-5,
    target_block_tokens: int = 512,
) -> jax.Array:
    """PatchMerging forward.

    x:     (B, H, W, C)   channels-last input (kept in its own dtype)
    w:     (4C, 2C)       reduction weight, pre-transposed vs torch
                          (torch nn.Linear(4C,2C).weight is (2C,4C); pass weight.T)
                          with rows in torch's [x0, x1, x2, x3] block order
    gamma: (2C,)          LayerNorm weight
    beta:  (2C,)          LayerNorm bias
    returns (B, ceil(H/2), ceil(W/2), 2C) in x.dtype
    """
    B, H, W, C = x.shape
    c4, c2out = w.shape
    assert c4 == 4 * C and c2out == 2 * C, (w.shape, C)

    # Pad H, W to even (matches torch patch_merging_pad); no-op when even.
    if (H % 2) or (W % 2):
        x = jnp.pad(x, ((0, 0), (0, H % 2), (0, W % 2), (0, 0)))
    Hp, Wp = x.shape[1], x.shape[2]
    Ho, Wo = Hp // 2, Wp // 2
    c2in = 2 * C
    R = B * Ho                          # merged rows
    N = R * Wo                          # merged tokens

    # Free contiguous reshape: (B, 2Ho, 2Wo, C) -> (B*Ho, 2, Wo, 2C).
    # dim 1 = h-parity; the 2C lanes of token (r, wo) are [w-even C | w-odd C].
    xr = x.reshape(R, 2, Wo, c2in)

    # Row-permuted weight halves (tiny, trace time). torch merged-channel order
    # is [x0, x1, x2, x3] = [(h0,w0), (h1,w0), (h0,w1), (h1,w1)] blocks of C rows.
    w = w.astype(x.dtype)               # keep MXU operands in the model dtype
    w_h0 = jnp.concatenate([w[0 * C:1 * C], w[2 * C:3 * C]], axis=0)  # h-even: [x0; x2]
    w_h1 = jnp.concatenate([w[1 * C:2 * C], w[3 * C:4 * C]], axis=0)  # h-odd:  [x1; x3]
    g2 = gamma.reshape(1, c2out).astype(jnp.float32)
    b2 = beta.reshape(1, c2out).astype(jnp.float32)

    itemsize = jnp.dtype(x.dtype).itemsize
    vmem_limit = _pick_vmem_limit()
    tr = _pick_row_tile(R, Wo, C, itemsize, target_block_tokens, vmem_limit)
    grid_steps = pl.cdiv(R, tr)         # last block may be partial (OOB masked)

    kernel = functools.partial(_merge_reduce_norm_kernel,
                               eps=float(eps), inv_d=1.0 / float(c2out))

    out2d = pl.pallas_call(
        kernel,
        out_shape=jax.ShapeDtypeStruct((N, c2out), x.dtype),
        grid_spec=pltpu.PrefetchScalarGridSpec(
            num_scalar_prefetch=0,
            grid=(grid_steps,),
            in_specs=[
                # Fused token tile: one fully contiguous HBM DMA per step.
                pl.BlockSpec((tr, 2, Wo, c2in), lambda i: (i, 0, 0, 0)),
                # Resident weight halves / LN params: constant index, single
                # buffer (saves ~half the weight VMEM at large C on v7x).
                pl.BlockSpec((c2in, c2out), lambda i: (0, 0),
                             pipeline_mode=pl.Buffered(1)),
                pl.BlockSpec((c2in, c2out), lambda i: (0, 0),
                             pipeline_mode=pl.Buffered(1)),
                pl.BlockSpec((1, c2out), lambda i: (0, 0),
                             pipeline_mode=pl.Buffered(1)),
                pl.BlockSpec((1, c2out), lambda i: (0, 0),
                             pipeline_mode=pl.Buffered(1)),
            ],
            # Flat lane-dense output block; no in-kernel reshape on the store.
            out_specs=pl.BlockSpec((tr * Wo, c2out), lambda i: (i, 0)),
        ),
        compiler_params=pltpu.CompilerParams(
            dimension_semantics=("parallel",),
            vmem_limit_bytes=vmem_limit,
        ),
    )(xr, w_h0, w_h1, g2, b2)

    return out2d.reshape(B, Ho, Wo, c2out)


# --------------------------- plain-JAX reference ----------------------------

def _patch_merging_pad_reference(x: jax.Array) -> jax.Array:
    B, H, W, C = x.shape
    x = jnp.pad(x, ((0, 0), (0, H % 2), (0, W % 2), (0, 0)))
    x0 = x[:, 0::2, 0::2, :]
    x1 = x[:, 1::2, 0::2, :]
    x2 = x[:, 0::2, 1::2, :]
    x3 = x[:, 1::2, 1::2, :]
    return jnp.concatenate([x0, x1, x2, x3], axis=-1)


def reference_forward(x, w, gamma, beta, eps=1e-5):
    merged = _patch_merging_pad_reference(x).astype(jnp.float32)
    y = jnp.einsum("bhwc,cd->bhwd", merged, w.astype(jnp.float32),
                   precision=lax.Precision.HIGHEST)
    mean = jnp.mean(y, axis=-1, keepdims=True)
    var = jnp.mean((y - mean) ** 2, axis=-1, keepdims=True)
    yn = (y - mean) / jnp.sqrt(var + eps)
    return yn * gamma.astype(jnp.float32) + beta.astype(jnp.float32)


# ----------------------------------- main ------------------------------------

if __name__ == "__main__":
    key = jax.random.PRNGKey(0)
    k_x, k_w, k_x2 = jax.random.split(key, 3)

    # Main small test: B=2, H=W=16, C=64 -> 2C = 128 (lane-dense output).
    B, H, W, C = 2, 16, 16, 64
    x = jax.random.normal(k_x, (B, H, W, C), dtype=jnp.float32)
    bound = 1.0 / (4.0 * C) ** 0.5
    w = jax.random.uniform(k_w, (4 * C, 2 * C), minval=-bound, maxval=bound,
                           dtype=jnp.float32)
    gamma = jnp.ones((2 * C,), dtype=jnp.float32)
    beta = jnp.zeros((2 * C,), dtype=jnp.float32)

    ref = reference_forward(x, w, gamma, beta)

    out = jax.block_until_ready(patch_merging_forward(x, w, gamma, beta))
    assert out.shape == (B, H // 2, W // 2, 2 * C), out.shape
    err = float(jnp.max(jnp.abs(out.astype(jnp.float32) - ref)))
    assert err < 3e-2, err

    # bf16 production path (bf16 operands in HBM / on the MXU, f32 accumulation).
    out_bf16 = jax.block_until_ready(
        patch_merging_forward(x.astype(jnp.bfloat16), w.astype(jnp.bfloat16),
                              gamma, beta))
    err_bf16 = float(jnp.max(jnp.abs(out_bf16.astype(jnp.float32) - ref)))
    assert err_bf16 < 0.25, err_bf16

    # Odd-H padding, Wo=7 (unaligned sublane repack path) and a partial last
    # grid block (R=21, tr=8 -> 3 grid steps, last one OOB-masked).
    B2, H2, W2, C2 = 3, 13, 14, 32
    x2 = jax.random.normal(k_x2, (B2, H2, W2, C2), dtype=jnp.float32)
    bound2 = 1.0 / (4.0 * C2) ** 0.5
    w2 = jax.random.uniform(k_w, (4 * C2, 2 * C2), minval=-bound2, maxval=bound2,
                            dtype=jnp.float32)
    gamma2 = jnp.linspace(0.5, 1.5, 2 * C2, dtype=jnp.float32)
    beta2 = jnp.linspace(-0.2, 0.2, 2 * C2, dtype=jnp.float32)

    ref2 = reference_forward(x2, w2, gamma2, beta2)
    out2 = jax.block_until_ready(patch_merging_forward(x2, w2, gamma2, beta2))
    assert out2.shape == (B2, (H2 + 1) // 2, W2 // 2, 2 * C2), out2.shape
    err2 = float(jnp.max(jnp.abs(out2.astype(jnp.float32) - ref2)))
    assert err2 < 3e-2, err2

    print("KERNEL_OK")
</pallas_src>

<mosaic_0001>
module attributes {stable_mosaic.version = 11 : i64} {
  func.func @_merge_reduce_norm_kernel(%arg0: i32, %arg1: memref<2x2x8x128xf32, #tpu.memory_space<vmem>>, %arg2: memref<128x128xf32, #tpu.memory_space<vmem>>, %arg3: memref<128x128xf32, #tpu.memory_space<vmem>>, %arg4: memref<1x128xf32, #tpu.memory_space<vmem>>, %arg5: memref<1x128xf32, #tpu.memory_space<vmem>>, %arg6: memref<16x128xf32, #tpu.memory_space<vmem>>) attributes {dimension_semantics = [#tpu.dimension_semantics<parallel>], iteration_bounds = array<i64: 8>, scalar_prefetch = 0 : i64, scratch_operands = 0 : i64, tpu.core_type = #tpu.core_type<tc>, window_params = [{transform_indices = @transform_0, window_bounds = array<i64: 2, 2, 8, 128>}, {pipeline_mode = #tpu.pipeline_mode<synchronous>, transform_indices = @transform_1, window_bounds = array<i64: 128, 128>}, {pipeline_mode = #tpu.pipeline_mode<synchronous>, transform_indices = @transform_2, window_bounds = array<i64: 128, 128>}, {pipeline_mode = #tpu.pipeline_mode<synchronous>, transform_indices = @transform_3, window_bounds = array<i64: 1, 128>}, {pipeline_mode = #tpu.pipeline_mode<synchronous>, transform_indices = @transform_4, window_bounds = array<i64: 1, 128>}, {transform_indices = @transform_5, window_bounds = array<i64: 16, 128>}]} {
    %c0 = arith.constant 0 : index
    %c0_0 = arith.constant 0 : index
    %c0_1 = arith.constant 0 : index
    %c0_2 = arith.constant 0 : index
    %0 = vector.load %arg1[%c0, %c0_0, %c0_1, %c0_2] : memref<2x2x8x128xf32, #tpu.memory_space<vmem>>, vector<2x1x8x128xf32>
    %1 = vector.shape_cast %0 : vector<2x1x8x128xf32> to vector<2x8x128xf32>
    %2 = vector.shape_cast %1 : vector<2x8x128xf32> to vector<16x128xf32>
    %c0_3 = arith.constant 0 : index
    %c1 = arith.constant 1 : index
    %c0_4 = arith.constant 0 : index
    %c0_5 = arith.constant 0 : index
    %3 = vector.load %arg1[%c0_3, %c1, %c0_4, %c0_5] : memref<2x2x8x128xf32, #tpu.memory_space<vmem>>, vector<2x1x8x128xf32>
    %4 = vector.shape_cast %3 : vector<2x1x8x128xf32> to vector<2x8x128xf32>
    %5 = vector.shape_cast %4 : vector<2x8x128xf32> to vector<16x128xf32>
    %c0_6 = arith.constant 0 : index
    %c0_7 = arith.constant 0 : index
    %6 = vector.load %arg2[%c0_6, %c0_7] : memref<128x128xf32, #tpu.memory_space<vmem>>, vector<128x128xf32>
    %cst = arith.constant dense<0.000000e+00> : vector<16x128xf32>
    %7 = tpu.matmul %2, %6, %cst {dimension_numbers = #tpu.dot_dimension_numbers<[1], [0], [0], [1], [0, 0, 1, 1], [], []>} : vector<16x128xf32>, vector<128x128xf32>, vector<16x128xf32> -> vector<16x128xf32>
    %c0_8 = arith.constant 0 : index
    %c0_9 = arith.constant 0 : index
    %8 = vector.load %arg3[%c0_8, %c0_9] : memref<128x128xf32, #tpu.memory_space<vmem>>, vector<128x128xf32>
    %cst_10 = arith.constant dense<0.000000e+00> : vector<16x128xf32>
    %9 = tpu.matmul %5, %8, %cst_10 {dimension_numbers = #tpu.dot_dimension_numbers<[1], [0], [0], [1], [0, 0, 1, 1], [], []>} : vector<16x128xf32>, vector<128x128xf32>, vector<16x128xf32> -> vector<16x128xf32>
    %10 = arith.addf %7, %9 : vector<16x128xf32>
    %cst_11 = arith.constant dense<0.000000e+00> : vector<16xf32>
    %11 = vector.multi_reduction <add>, %10, %cst_11 [1] : vector<16x128xf32> to vector<16xf32>
    %12 = vector.shape_cast %11 : vector<16xf32> to vector<16x1xf32>
    %cst_12 = arith.constant 7.812500e-03 : f32
    %13 = vector.broadcast %cst_12 : f32 to vector<16x1xf32>
    %14 = arith.mulf %12, %13 : vector<16x1xf32>
    %15 = vector.broadcast %14 : vector<16x1xf32> to vector<16x128xf32>
    %16 = arith.subf %10, %15 : vector<16x128xf32>
    %17 = arith.mulf %16, %16 : vector<16x128xf32>
    %cst_13 = arith.constant dense<0.000000e+00> : vector<16xf32>
    %18 = vector.multi_reduction <add>, %17, %cst_13 [1] : vector<16x128xf32> to vector<16xf32>
    %19 = vector.shape_cast %18 : vector<16xf32> to vector<16x1xf32>
    %cst_14 = arith.constant 7.812500e-03 : f32
    %20 = vector.broadcast %cst_14 : f32 to vector<16x1xf32>
    %21 = arith.mulf %19, %20 : vector<16x1xf32>
    %cst_15 = arith.constant 9.99999974E-6 : f32
    %22 = vector.broadcast %cst_15 : f32 to vector<16x1xf32>
    %23 = arith.addf %21, %22 : vector<16x1xf32>
    %24 = math.rsqrt %23 : vector<16x1xf32>
    %25 = vector.broadcast %24 : vector<16x1xf32> to vector<16x128xf32>
    %26 = arith.mulf %16, %25 : vector<16x128xf32>
    %c0_16 = arith.constant 0 : index
    %c0_17 = arith.constant 0 : index
    %27 = vector.load %arg4[%c0_16, %c0_17] : memref<1x128xf32, #tpu.memory_space<vmem>>, vector<1x128xf32>
    %28 = vector.broadcast %27 : vector<1x128xf32> to vector<16x128xf32>
    %29 = arith.mulf %26, %28 : vector<16x128xf32>
    %c0_18 = arith.constant 0 : index
    %c0_19 = arith.constant 0 : index
    %30 = vector.load %arg5[%c0_18, %c0_19] : memref<1x128xf32, #tpu.memory_space<vmem>>, vector<1x128xf32>
    %31 = vector.broadcast %30 : vector<1x128xf32> to vector<16x128xf32>
    %32 = arith.addf %29, %31 : vector<16x128xf32>
    %c0_20 = arith.constant 0 : index
    %c0_21 = arith.constant 0 : index
    %33 = vector.load %arg6[%c0_20, %c0_21] : memref<16x128xf32, #tpu.memory_space<vmem>>, vector<16x128xf32>
    tpu.vector_store %arg6[%c0_20, %c0_21], %32 {strides = array<i32>} : memref<16x128xf32, #tpu.memory_space<vmem>>, vector<16x128xf32>,
    return
  }
  func.func @transform_0(%arg0: i32) -> (i32, i32, i32, i32) {
    %c0_i32 = arith.constant 0 : i32
    %c0_i32_0 = arith.constant 0 : i32
    %c0_i32_1 = arith.constant 0 : i32
    %c0_i32_2 = arith.constant 0 : i32
    return %arg0, %c0_i32, %c0_i32_0, %c0_i32_1 : i32, i32, i32, i32
  }
  func.func @transform_1(%arg0: i32) -> (i32, i32) {
    %c0_i32 = arith.constant 0 : i32
    %c0_i32_0 = arith.constant 0 : i32
    %c0_i32_1 = arith.constant 0 : i32
    return %c0_i32, %c0_i32_0 : i32, i32
  }
  func.func @transform_2(%arg0: i32) -> (i32, i32) {
    %c0_i32 = arith.constant 0 : i32
    %c0_i32_0 = arith.constant 0 : i32
    %c0_i32_1 = arith.constant 0 : i32
    return %c0_i32, %c0_i32_0 : i32, i32
  }
  func.func @transform_3(%arg0: i32) -> (i32, i32) {
    %c0_i32 = arith.constant 0 : i32
    %c0_i32_0 = arith.constant 0 : i32
    %c0_i32_1 = arith.constant 0 : i32
    return %c0_i32, %c0_i32_0 : i32, i32
  }
  func.func @transform_4(%arg0: i32) -> (i32, i32) {
    %c0_i32 = arith.constant 0 : i32
    %c0_i32_0 = arith.constant 0 : i32
    %c0_i32_1 = arith.constant 0 : i32
    return %c0_i32, %c0_i32_0 : i32, i32
  }
  func.func @transform_5(%arg0: i32) -> (i32, i32) {
    %c0_i32 = arith.constant 0 : i32
    %c0_i32_0 = arith.constant 0 : i32
    return %arg0, %c0_i32 : i32, i32
  }
}

</mosaic_0001>

<llo_original>
// kernel: tpu_custom_call.1
$region0: #{tpu_custom_call.1}
  #allocation0 [shape = 'u32[]', space=smem, size = 0x4, offset = 0x4, fixed_abs, tag = 'smem constant byte address 0x4 - core index']
  #allocation1 [shape = 'u32[144,128]{1,0:T(1,128)}', space=vmem, size = 0x12000, scoped, tag = 'internal scratch']
  %s0 = inlined_call_operand.hbm [shape: f32[16,2,8,128], index: 0, kind: input, shape index: {}]
  %s1 = inlined_call_operand.hbm [shape: f32[128,128], index: 1, kind: input, shape index: {}]
  %s2 = inlined_call_operand.hbm [shape: f32[128,128], index: 2, kind: input, shape index: {}]
  %s3 = inlined_call_operand.vmem [shape: f32[1,128], index: 3, kind: input, shape index: {}]
  %s4 = inlined_call_operand.vmem [shape: f32[1,128], index: 4, kind: input, shape index: {}]
  %s5 = inlined_call_operand.hbm [shape: f32[128,128], index: 5, kind: output, shape index: {}]
  %s6 = sld [smem:[#allocation0]]
  $region65: #{tpu_custom_call.1} parent=0
    _
  %s8 = ssub.s32 1, %s6
  %s9 = scalar_select 0, %s8, %s6
  $region1: #{tpu_custom_call.1} parent=0
    #allocation2 [shape = 'u8[32768]{0}', space=vmem, size = 0x8000, scoped, tag = 'input window, operand 0']
    #allocation3 [shape = 's32[2]{0}', space=sflag, size = 0x8, scoped, tag = 'scoped memory for tpu_custom_call.1']
    #allocation4 [shape = 's32[2]{0}', space=sflag, size = 0x8, scoped, tag = 'scoped memory for tpu_custom_call.1']
    #allocation5 [shape = 'u8[65536]{0}', space=vmem, size = 0x10000, scoped, tag = 'input window, operand 1, single buffered']
    #allocation6 [shape = 's32[1]{0}', space=sflag, size = 0x4, scoped, tag = 'scoped memory for tpu_custom_call.1']
    #allocation7 [shape = 'u8[65536]{0}', space=vmem, size = 0x10000, scoped, tag = 'input window, operand 2, single buffered']
    #allocation8 [shape = 'u8[16384]{0}', space=vmem, size = 0x4000, scoped, tag = 'output window, operand 0']
    %10 = vsyncpa [#allocation3], 0
    %s11 = scalar_lea.sflag [#allocation3], 1
    %12 = vsyncpa %s11, 0
    %13 = vsyncpa [#allocation6], 0
    %14 = vsyncpa [#allocation4], 0
    %s15 = scalar_lea.sflag [#allocation4], 1
    %16 = vsyncpa %s15, 0
    loop: start=0, step=1, limit=10
    $region2: #{tpu_custom_call.1} parent=1 // loop_pre_header
      _
    $region3: #{tpu_custom_call.1} parent=1 // loop_header
      %s18 = sphi 0, %s22
      %p19 = scmp.ge.s32.totalorder %s18, 10
      %s28 = sphi 0, %s30
      %s31 = sphi 0, %s28
      %s32 = sphi 0, %s31
      %s48 = sphi 0, %s32
      %s52 = sphi 0, %s52
      %s54 = sphi 0, %s52
      %s55 = sphi 0, %s54
      %s69 = sphi 0, %s55
      %s73 = sphi 0, %s73
      %s75 = sphi 0, %s73
      %s76 = sphi 0, %s75
      %s90 = sphi 0, %s76
      %s94 = sphi 0, %s94
      %s96 = sphi 0, %s94
      %s97 = sphi 0, %s96
      %s111 = sphi 0, %s97
      %s115 = sphi 0, %s115
      %s117 = sphi 0, %s115
      %s118 = sphi 0, %s117
      %s132 = sphi 0, %s118
      %s138 = sphi 0, %s140
      %s141 = sphi 0, %s138
      %s142 = sphi 0, %s141
      %s158 = sphi 0, %s142
    $region4: #{tpu_custom_call.1} parent=1 // loop_header_branch
      %21 = sbr.rel (%p19) target = $region8
    $region5: #{tpu_custom_call.1} parent=1 // loop_body
      %s23 = ssub.s32 %s18, 1
      %s24 = ssub.s32 %s18, 2
      %s25 = sadd.s32 %s18, 1
      %s26 = ssub.s32 %s18, %s25
      %p27 = scmp.eq.s32.totalorder %s26, 0
      %s29 = sadd.s32 %s28, 1
      %s30 = scalar_select %p27, %s28, %s29
      %p33 = pneg %p27
      %p34 = scmp.eq.s32.totalorder %s18, 7
      %p35 = por %p33, %p34
      %p36 = scmp.ne.s32.totalorder %s28, %s31
      %p37 = scmp.eq.s32.totalorder %s18, 0
      %p38 = por %p36, %p37
      %p39 = scmp.ne.s32.totalorder %s28, %s31
      %p40 = scmp.eq.s32.totalorder %s23, 7
      %p41 = por %p39, %p40
      %p42 = scmp.ne.s32.totalorder %s31, %s32
      %p43 = scmp.eq.s32.totalorder %s23, 0
      %p44 = por %p42, %p43
      %p45 = scmp.ne.s32.totalorder %s31, %s32
      %p46 = scmp.eq.s32.totalorder %s24, 7
      %p47 = por %p45, %p46
      %p49 = scmp.ne.s32.totalorder %s32, %s48
      %p50 = scmp.eq.s32.totalorder %s24, 0
      %p51 = por %p49, %p50
      %s53 = sadd.s32 %s52, 1
      %p56 = scmp.eq.s32.totalorder %s18, 7
      %p57 = scmp.ne.s32.totalorder %s52, %s54
      %p58 = scmp.eq.s32.totalorder %s18, 0
      %p59 = por %p57, %p58
      %p60 = scmp.ne.s32.totalorder %s52, %s54
      %p61 = scmp.eq.s32.totalorder %s23, 7
      %p62 = por %p60, %p61
      %p63 = scmp.ne.s32.totalorder %s54, %s55
      %p64 = scmp.eq.s32.totalorder %s23, 0
      %p65 = por %p63, %p64
      %p66 = scmp.ne.s32.totalorder %s54, %s55
      %p67 = scmp.eq.s32.totalorder %s24, 7
      %p68 = por %p66, %p67
      %p70 = scmp.ne.s32.totalorder %s55, %s69
      %p71 = scmp.eq.s32.totalorder %s24, 0
      %p72 = por %p70, %p71
      %s74 = sadd.s32 %s73, 1
      %p77 = scmp.eq.s32.totalorder %s18, 7
      %p78 = scmp.ne.s32.totalorder %s73, %s75
      %p79 = scmp.eq.s32.totalorder %s18, 0
      %p80 = por %p78, %p79
      %p81 = scmp.ne.s32.totalorder %s73, %s75
      %p82 = scmp.eq.s32.totalorder %s23, 7
      %p83 = por %p81, %p82
      %p84 = scmp.ne.s32.totalorder %s75, %s76
      %p85 = scmp.eq.s32.totalorder %s23, 0
      %p86 = por %p84, %p85
      %p87 = scmp.ne.s32.totalorder %s75, %s76
      %p88 = scmp.eq.s32.totalorder %s24, 7
      %p89 = por %p87, %p88
      %p91 = scmp.ne.s32.totalorder %s76, %s90
      %p92 = scmp.eq.s32.totalorder %s24, 0
      %p93 = por %p91, %p92
      %s95 = sadd.s32 %s94, 1
      %p98 = scmp.eq.s32.totalorder %s18, 7
      %p99 = scmp.ne.s32.totalorder %s94, %s96
      %p100 = scmp.eq.s32.totalorder %s18, 0
      %p101 = por %p99, %p100
      %p102 = scmp.ne.s32.totalorder %s94, %s96
      %p103 = scmp.eq.s32.totalorder %s23, 7
      %p104 = por %p102, %p103
      %p105 = scmp.ne.s32.totalorder %s96, %s97
      %p106 = scmp.eq.s32.totalorder %s23, 0
      %p107 = por %p105, %p106
      %p108 = scmp.ne.s32.totalorder %s96, %s97
      %p109 = scmp.eq.s32.totalorder %s24, 7
      %p110 = por %p108, %p109
      %p112 = scmp.ne.s32.totalorder %s97, %s111
      %p113 = scmp.eq.s32.totalorder %s24, 0
      %p114 = por %p112, %p113
      %s116 = sadd.s32 %s115, 1
      %p119 = scmp.eq.s32.totalorder %s18, 7
      %p120 = scmp.ne.s32.totalorder %s115, %s117
      %p121 = scmp.eq.s32.totalorder %s18, 0
      %p122 = por %p120, %p121
      %p123 = scmp.ne.s32.totalorder %s115, %s117
      %p124 = scmp.eq.s32.totalorder %s23, 7
      %p125 = por %p123, %p124
      %p126 = scmp.ne.s32.totalorder %s117, %s118
      %p127 = scmp.eq.s32.totalorder %s23, 0
      %p128 = por %p126, %p127
      %p129 = scmp.ne.s32.totalorder %s117, %s118
      %p130 = scmp.eq.s32.totalorder %s24, 7
      %p131 = por %p129, %p130
      %p133 = scmp.ne.s32.totalorder %s118, %s132
      %p134 = scmp.eq.s32.totalorder %s24, 0
      %p135 = por %p133, %p134
      %s136 = ssub.s32 %s18, %s25
      %p137 = scmp.eq.s32.totalorder %s136, 0
      %s139 = sadd.s32 %s138, 1
      %s140 = scalar_select %p137, %s138, %s139
      %p143 = pneg %p137
      %p144 = scmp.eq.s32.totalorder %s18, 7
      %p145 = por %p143, %p144
      %p146 = scmp.ne.s32.totalorder %s138, %s141
      %p147 = scmp.eq.s32.totalorder %s18, 0
      %p148 = por %p146, %p147
      %p149 = scmp.ne.s32.totalorder %s138, %s141
      %p150 = scmp.eq.s32.totalorder %s23, 7
      %p151 = por %p149, %p150
      %p152 = scmp.ne.s32.totalorder %s141, %s142
      %p153 = scmp.eq.s32.totalorder %s23, 0
      %p154 = por %p152, %p153
      %p155 = scmp.ne.s32.totalorder %s141, %s142
      %p156 = scmp.eq.s32.totalorder %s24, 7
      %p157 = por %p155, %p156
      %p159 = scmp.ne.s32.totalorder %s142, %s158
      %p160 = scmp.eq.s32.totalorder %s24, 0
      %p161 = por %p159, %p160
      %p162 = scmp.le.s32.totalorder 1, %s18
      %p163 = scmp.lt.s32.totalorder %s18, 9
      %p164 = pnand %p162, %p163
      %p165 = pneg %p164
      // Predicated region
      $region9: #{tpu_custom_call.1} parent=5 // pred_check
        _
      $region10: #{tpu_custom_call.1} parent=5 // pred_check_branch
        %167 = sbr.rel (%p164) target = $region12
      $region11: #{tpu_custom_call.1} parent=5 // pred_region
        %s168 = ssub.s32 %s18, 1
        // Predicated region
        $region13: #{tpu_custom_call.1} parent=11 // pred_check
          %p169 = pneg %p65
        $region14: #{tpu_custom_call.1} parent=11 // pred_check_branch
          %171 = sbr.rel (%p169) target = $region16
        $region15: #{tpu_custom_call.1} parent=11 // pred_region
          %s173 = ssub.s32 2048, 2048
          %174 = vsyncadd [#allocation6], %s173
          %s175 = sshll.u32 [#allocation5], 4
          %s176 = int_to_ptr.vmem [resolvable:$true] %s175
          %181 = dma.hbm_to_vmem [thread:$0]  %s1, 2048, %s176, [#allocation6], 128, 128, 8
        $region16: #{tpu_custom_call.1} parent=11 // pred_fallthru
          _
        // Predicated region
        $region17: #{tpu_custom_call.1} parent=11 // pred_check
          %p182 = pneg %p86
        $region18: #{tpu_custom_call.1} parent=11 // pred_check_branch
          %184 = sbr.rel (%p182) target = $region20
        $region19: #{tpu_custom_call.1} parent=11 // pred_region
          %s186 = ssub.s32 2048, 2048
          %187 = vsyncadd [#allocation6], %s186
          %s188 = sshll.u32 [#allocation7], 4
          %s189 = int_to_ptr.vmem [resolvable:$true] %s188
          %194 = dma.hbm_to_vmem [thread:$0]  %s2, 2048, %s189, [#allocation6], 128, 128, 8
        $region20: #{tpu_custom_call.1} parent=11 // pred_fallthru
          _
        // Predicated region
        $region21: #{tpu_custom_call.1} parent=11 // pred_check
          %p195 = pneg %p107
        $region22: #{tpu_custom_call.1} parent=11 // pred_check_branch
          %197 = sbr.rel (%p195) target = $region24
        $region23: #{tpu_custom_call.1} parent=11 // pred_region
          _
        $region24: #{tpu_custom_call.1} parent=11 // pred_fallthru
          _
        // Predicated region
        $region25: #{tpu_custom_call.1} parent=11 // pred_check
          %p198 = pneg %p128
        $region26: #{tpu_custom_call.1} parent=11 // pred_check_branch
          %200 = sbr.rel (%p198) target = $region28
        $region27: #{tpu_custom_call.1} parent=11 // pred_region
          _
        $region28: #{tpu_custom_call.1} parent=11 // pred_fallthru
          _
      $region12: #{tpu_custom_call.1} parent=5 // pred_fallthru
        _
      %p201 = scmp.lt.s32.totalorder %s18, 8
      // Predicated region
      $region29: #{tpu_custom_call.1} parent=5 // pred_check
        %p202 = pneg %p201
      $region30: #{tpu_custom_call.1} parent=5 // pred_check_branch
        %204 = sbr.rel (%p202) target = $region32
      $region31: #{tpu_custom_call.1} parent=5 // pred_region
        // Predicated region
        $region33: #{tpu_custom_call.1} parent=31 // pred_check
          %p205 = pneg %p38
        $region34: #{tpu_custom_call.1} parent=31 // pred_check_branch
          %207 = sbr.rel (%p205) target = $region36
        $region35: #{tpu_custom_call.1} parent=31 // pred_region
          %s208 = sand.u32 %s28, 1
          %s209 = scalar_lea.sflag [#allocation3], %s208
          %s210 = sand.u32 %s28, 1
          %s211 = smul.addr %s210, 32
          %s212 = scalar_lea.vmem [#allocation2], %s211
          %s213 = smul.u32 2, %s18
          %s215 = ssub.s32 512, 512
          %216 = vsyncadd %s209, %s215
          %s217 = smul.addr %s213, 2
          %s218 = smul.addr %s217, 128
          %s219 = scalar_lea.hbm %s0, %s218
          %s220 = sshll.u32 %s212, 4
          %s221 = int_to_ptr.vmem [resolvable:$true] %s220
          %226 = dma.hbm_to_vmem [thread:$0]  %s219, 512, %s221, %s209, 128, 128, 8
        $region36: #{tpu_custom_call.1} parent=31 // pred_fallthru
          _
      $region32: #{tpu_custom_call.1} parent=5 // pred_fallthru
        _
      %p227 = scmp.le.s32.totalorder 1, %s18
      %p228 = scmp.lt.s32.totalorder %s18, 9
      %p229 = pnand %p227, %p228
      %p230 = pneg %p229
      // Predicated region
      $region37: #{tpu_custom_call.1} parent=5 // pred_check
        _
      $region38: #{tpu_custom_call.1} parent=5 // pred_check_branch
        %232 = sbr.rel (%p229) target = $region40
      $region39: #{tpu_custom_call.1} parent=5 // pred_region
        %s233 = ssub.s32 %s18, 1
        %s234 = sand.u32 %s31, 1
        %s235 = scalar_lea.sflag [#allocation3], %s234
        %s236 = sand.u32 %s31, 1
        %s237 = smul.addr %s236, 32
        %s238 = scalar_lea.vmem [#allocation2], %s237
        // Predicated region
        $region41: #{tpu_custom_call.1} parent=39 // pred_check
          %p239 = pneg %p44
        $region42: #{tpu_custom_call.1} parent=39 // pred_check_branch
          %241 = sbr.rel (%p239) target = $region44
        $region43: #{tpu_custom_call.1} parent=39 // pred_region
          %242 = dma.done %s235, 512
        $region44: #{tpu_custom_call.1} parent=39 // pred_fallthru
          _
        // Predicated region
        $region45: #{tpu_custom_call.1} parent=39 // pred_check
          %p243 = pneg %p65
        $region46: #{tpu_custom_call.1} parent=39 // pred_check_branch
          %245 = sbr.rel (%p243) target = $region48
        $region47: #{tpu_custom_call.1} parent=39 // pred_region
          %246 = dma.done [#allocation6], 2048
        $region48: #{tpu_custom_call.1} parent=39 // pred_fallthru
          _
        // Predicated region
        $region49: #{tpu_custom_call.1} parent=39 // pred_check
          %p247 = pneg %p86
        $region50: #{tpu_custom_call.1} parent=39 // pred_check_branch
          %249 = sbr.rel (%p247) target = $region52
        $region51: #{tpu_custom_call.1} parent=39 // pred_region
          %250 = dma.done [#allocation6], 2048
        $region52: #{tpu_custom_call.1} parent=39 // pred_fallthru
          _
        %s251 = sand.u32 %s31, 1
        %s252 = scalar_lea.sflag [#allocation3], %s251
        %s253 = sand.u32 %s31, 1
        %s254 = smul.addr %s253, 32
        %s255 = scalar_lea.vmem [#allocation2], %s254
        %p256 = pneg %p44
        %p257 = pneg %p41
        %p258 = pneg %p65
        %p259 = pneg %p62
        %p260 = pneg %p86
        %p261 = pneg %p83
        %p262 = pneg %p107
        %p263 = pneg %p104
        %p264 = pneg %p128
        %p265 = pneg %p125
        %p266 = pneg %p154
        %p267 = pneg %p151
        %s268 = sand.u32 %s141, 1
        %s269 = scalar_lea.sflag [#allocation4], %s268
        %s270 = sand.u32 %s141, 1
        %s271 = smul.addr %s270, 16
        %s272 = scalar_lea.vmem [#allocation8], %s271
        %s273 = smul.u32 2, %s23
        %s274 = smul.u32 2, %s23
        %v275 = vld [vmem:[%s238] sm:$0xff]
        %v276 = vld [vmem:[%s238 + $0x10] sm:$0xff]
        %s277 = scalar_lea.vmem %s238, 8 [#allocation2]
        %v278 = vld [vmem:[%s277] sm:$0xff]
        %v279 = vld [vmem:[%s277 + $0x10] sm:$0xff]
        %v280 = vld [vmem:[#allocation5] sm:$0xff]
        %v281 = vld [vmem:[#allocation5 + $0x8] sm:$0xff]
        %v282 = vld [vmem:[#allocation5 + $0x10] sm:$0xff]
        %v283 = vld [vmem:[#allocation5 + $0x18] sm:$0xff]
        %v284 = vld [vmem:[#allocation5 + $0x20] sm:$0xff]
        %v285 = vld [vmem:[#allocation5 + $0x28] sm:$0xff]
        %v286 = vld [vmem:[#allocation5 + $0x30] sm:$0xff]
        %v287 = vld [vmem:[#allocation5 + $0x38] sm:$0xff]
        %v288 = vld [vmem:[#allocation5 + $0x40] sm:$0xff]
        %v289 = vld [vmem:[#allocation5 + $0x48] sm:$0xff]
        %v290 = vld [vmem:[#allocation5 + $0x50] sm:$0xff]
        %v291 = vld [vmem:[#allocation5 + $0x58] sm:$0xff]
        %v292 = vld [vmem:[#allocation5 + $0x60] sm:$0xff]
        %v293 = vld [vmem:[#allocation5 + $0x68] sm:$0xff]
        %v294 = vld [vmem:[#allocation5 + $0x70] sm:$0xff]
        %v295 = vld [vmem:[#allocation5 + $0x78] sm:$0xff]
        %v296 = vld [vmem:[#allocation7] sm:$0xff]
        %v297 = vld [vmem:[#allocation7 + $0x8] sm:$0xff]
        %v298 = vld [vmem:[#allocation7 + $0x10] sm:$0xff]
        %v299 = vld [vmem:[#allocation7 + $0x18] sm:$0xff]
        %v300 = vld [vmem:[#allocation7 + $0x20] sm:$0xff]
        %v301 = vld [vmem:[#allocation7 + $0x28] sm:$0xff]
        %v302 = vld [vmem:[#allocation7 + $0x30] sm:$0xff]
        %v303 = vld [vmem:[#allocation7 + $0x38] sm:$0xff]
        %v304 = vld [vmem:[#allocation7 + $0x40] sm:$0xff]
        %v305 = vld [vmem:[#allocation7 + $0x48] sm:$0xff]
        %v306 = vld [vmem:[#allocation7 + $0x50] sm:$0xff]
        %v307 = vld [vmem:[#allocation7 + $0x58] sm:$0xff]
        %v308 = vld [vmem:[#allocation7 + $0x60] sm:$0xff]
        %v309 = vld [vmem:[#allocation7 + $0x68] sm:$0xff]
        %v310 = vld [vmem:[#allocation7 + $0x70] sm:$0xff]
        %v311 = vld [vmem:[#allocation7 + $0x78] sm:$0xff]
        %312 = vmatprep.subr.mxu0 0.0
        %313 = vmatpush1.msra.mxu0 %v296
        %314 = vmatprep.subr.mxu0 0.0
        %315 = vmatpush1.msra.mxu0 %v297
        %316 = vmatprep.subr.mxu0 0.0
        %317 = vmatpush1.msra.mxu0 %v298
        %318 = vmatprep.subr.mxu0 0.0
        %319 = vmatpush1.msra.mxu0 %v299
        %320 = vmatprep.subr.mxu0 0.0
        %321 = vmatpush1.msra.mxu0 %v300
        %322 = vmatprep.subr.mxu0 0.0
        %323 = vmatpush1.msra.mxu0 %v301
        %324 = vmatprep.subr.mxu0 0.0
        %325 = vmatpush1.msra.mxu0 %v302
        %326 = vmatprep.subr.mxu0 0.0
        %327 = vmatpush1.msra.mxu0 %v303
        %328 = vmatprep.subr.mxu0 0.0
        %329 = vmatpush1.msra.mxu0 %v304
        %330 = vmatprep.subr.mxu0 0.0
        %331 = vmatpush1.msra.mxu0 %v305
        %332 = vmatprep.subr.mxu0 0.0
        %333 = vmatpush1.msra.mxu0 %v306
        %334 = vmatprep.subr.mxu0 0.0
        %335 = vmatpush1.msra.mxu0 %v307
        %336 = vmatprep.subr.mxu0 0.0
        %337 = vmatpush1.msra.mxu0 %v308
        %338 = vmatprep.subr.mxu0 0.0
        %339 = vmatpush1.msra.mxu0 %v309
        %340 = vmatprep.subr.mxu0 0.0
        %341 = vmatpush1.msra.mxu0 %v310
        %342 = vmatprep.subr.mxu0 0.0
        %343 = vmatpush1.msra.mxu0 %v311
        %344 = vmatprep.subr.mxu0 0.0
        %345 = vmatpush1.msra.mxu0 0.0
        %346 = vmatprep.subr.mxu0 0.0
        %347 = vmatpush1.msra.mxu0 0.0
        %348 = vmatprep.subr.mxu0 0.0
        %349 = vmatpush1.msra.mxu0 0.0
        %350 = vmatprep.subr.mxu0 0.0
        %351 = vmatpush1.msra.mxu0 0.0
        %352 = vmatprep.subr.mxu0 0.0
        %353 = vmatpush1.msra.mxu0 0.0
        %354 = vmatprep.subr.mxu0 0.0
        %355 = vmatpush1.msra.mxu0 0.0
        %356 = vmatprep.subr.mxu0 0.0
        %357 = vmatpush1.msra.mxu0 0.0
        %358 = vmatprep.subr.mxu0 0.0
        %359 = vmatpush1.msra.mxu0 0.0
        %360 = vmatprep.subr.mxu0 0.0
        %361 = vmatpush1.msra.mxu0 0.0
        %362 = vmatprep.subr.mxu0 0.0
        %363 = vmatpush1.msra.mxu0 0.0
        %364 = vmatprep.subr.mxu0 0.0
        %365 = vmatpush1.msra.mxu0 0.0
        %366 = vmatprep.subr.mxu0 0.0
        %367 = vmatpush1.msra.mxu0 0.0
        %368 = vmatprep.subr.mxu0 0.0
        %369 = vmatpush1.msra.mxu0 0.0
        %370 = vmatprep.subr.mxu0 0.0
        %371 = vmatpush1.msra.mxu0 0.0
        %372 = vmatprep.subr.mxu0 0.0
        %373 = vmatpush1.msra.mxu0 0.0
        %374 = vmatprep.subr.mxu0 0.0
        %375 = vmatpush1.msra.mxu0 0.0
        %376 = vmatprep.mubr.f32.mxu0 0.0
        %377 = vmatmul.mubr.f32.gmra.mrb[0].mxu0 %v278
        %v378 = vpop.f32.mrb[0].mxu0
        %v379 = vadd.f32 0.0, %v378
        %v380 = vpop.f32.mrb[0].mxu0
        %381 = vmatprep.mubr.f32.mxu0 0.0
        %382 = vmatmul.mubr.f32.gmra.mrb[0].mxu0 %v279
        %v383 = vpop.f32.mrb[0].mxu0
        %v384 = vadd.f32 0.0, %v383
        %v385 = vpop.f32.mrb[0].mxu0
        %386 = vdwg.mxu0
        %387 = vmatprep.subr.mxu0 0.0
        %388 = vmatpush1.msra.mxu0 %v280
        %389 = vmatprep.subr.mxu0 0.0
        %390 = vmatpush1.msra.mxu0 %v281
        %391 = vmatprep.subr.mxu0 0.0
        %392 = vmatpush1.msra.mxu0 %v282
        %393 = vmatprep.subr.mxu0 0.0
        %394 = vmatpush1.msra.mxu0 %v283
        %395 = vmatprep.subr.mxu0 0.0
        %396 = vmatpush1.msra.mxu0 %v284
        %397 = vmatprep.subr.mxu0 0.0
        %398 = vmatpush1.msra.mxu0 %v285
        %399 = vmatprep.subr.mxu0 0.0
        %400 = vmatpush1.msra.mxu0 %v286
        %401 = vmatprep.subr.mxu0 0.0
        %402 = vmatpush1.msra.mxu0 %v287
        %403 = vmatprep.subr.mxu0 0.0
        %404 = vmatpush1.msra.mxu0 %v288
        %405 = vmatprep.subr.mxu0 0.0
        %406 = vmatpush1.msra.mxu0 %v289
        %407 = vmatprep.subr.mxu0 0.0
        %408 = vmatpush1.msra.mxu0 %v290
        %409 = vmatprep.subr.mxu0 0.0
        %410 = vmatpush1.msra.mxu0 %v291
        %411 = vmatprep.subr.mxu0 0.0
        %412 = vmatpush1.msra.mxu0 %v292
        %413 = vmatprep.subr.mxu0 0.0
        %414 = vmatpush1.msra.mxu0 %v293
        %415 = vmatprep.subr.mxu0 0.0
        %416 = vmatpush1.msra.mxu0 %v294
        %417 = vmatprep.subr.mxu0 0.0
        %418 = vmatpush1.msra.mxu0 %v295
        %419 = vmatprep.subr.mxu0 0.0
        %420 = vmatpush1.msra.mxu0 0.0
        %421 = vmatprep.subr.mxu0 0.0
        %422 = vmatpush1.msra.mxu0 0.0
        %423 = vmatprep.subr.mxu0 0.0
        %424 = vmatpush1.msra.mxu0 0.0
        %425 = vmatprep.subr.mxu0 0.0
        %426 = vmatpush1.msra.mxu0 0.0
        %427 = vmatprep.subr.mxu0 0.0
        %428 = vmatpush1.msra.mxu0 0.0
        %429 = vmatprep.subr.mxu0 0.0
        %430 = vmatpush1.msra.mxu0 0.0
        %431 = vmatprep.subr.mxu0 0.0
        %432 = vmatpush1.msra.mxu0 0.0
        %433 = vmatprep.subr.mxu0 0.0
        %434 = vmatpush1.msra.mxu0 0.0
        %435 = vmatprep.subr.mxu0 0.0
        %436 = vmatpush1.msra.mxu0 0.0
        %437 = vmatprep.subr.mxu0 0.0
        %438 = vmatpush1.msra.mxu0 0.0
        %439 = vmatprep.subr.mxu0 0.0
        %440 = vmatpush1.msra.mxu0 0.0
        %441 = vmatprep.subr.mxu0 0.0
        %442 = vmatpush1.msra.mxu0 0.0
        %443 = vmatprep.subr.mxu0 0.0
        %444 = vmatpush1.msra.mxu0 0.0
        %445 = vmatprep.subr.mxu0 0.0
        %446 = vmatpush1.msra.mxu0 0.0
        %447 = vmatprep.subr.mxu0 0.0
        %448 = vmatpush1.msra.mxu0 0.0
        %449 = vmatprep.subr.mxu0 0.0
        %450 = vmatpush1.msra.mxu0 0.0
        %451 = vmatprep.mubr.f32.mxu0 0.0
        %452 = vmatmul.mubr.f32.gmra.mrb[0].mxu0 %v275
        %v453 = vpop.f32.mrb[0].mxu0
        %v454 = vadd.f32 %v379, %v453
        %v455 = vpop.f32.mrb[0].mxu0
        %456 = vmatprep.mubr.f32.mxu0 0.0
        %457 = vmatmul.mubr.f32.gmra.mrb[0].mxu0 %v276
        %v458 = vpop.f32.mrb[0].mxu0
        %v459 = vadd.f32 %v384, %v458
        %v460 = vpop.f32.mrb[0].mxu0
        %461 = vdwg.mxu0
        %462 = vadd.xlane.f32.xlu0 %v454
        %v463 = vpop.xlane.xlu0 %462
        %464 = vadd.xlane.f32.xlu0 %v459
        %v465 = vpop.xlane.xlu0 %464
        %v466 = vmul.f32 %v463, 0.0078125
        %v467 = vmul.f32 %v465, 0.0078125
        %v468 = vsub.f32 %v454, %v466
        %v469 = vsub.f32 %v459, %v467
        %v470 = vmul.f32 %v468, %v468
        %v471 = vmul.f32 %v469, %v469
        %472 = vadd.xlane.f32.xlu0 %v470
        %v473 = vpop.xlane.xlu0 %472
        %474 = vadd.xlane.f32.xlu0 %v471
        %v475 = vpop.xlane.xlu0 %474
        %v476 = vmul.f32 %v473, 0.0078125
        %v477 = vmul.f32 %v475, 0.0078125
        %v478 = vadd.f32 %v476, 1e-05
        %v479 = vadd.f32 %v477, 1e-05
        %v480 = vrsqrt.pop %v478
        %v481 = vrsqrt.pop %v479
        %v482 = vmul.f32 %v468, %v480
        %v483 = vmul.f32 %v469, %v481
        %v484 = vld [vmem:[%s3] sm:$0x1]
        %v486 = vlaneseq
        %v487 = vshrl.u32 %v486, 7
        %v488 = vsub.s32 0, %v487
        %v489 = vrot.slane %v484, %v488
        %v491 = vmul.f32 %v482, %v489
        %v492 = vmul.f32 %v483, %v489
        %v493 = vld [vmem:[%s4] sm:$0x1]
        %v495 = vlaneseq
        %v496 = vshrl.u32 %v495, 7
        %v497 = vsub.s32 0, %v496
        %v498 = vrot.slane %v493, %v497
        %v500 = vadd.f32 %v491, %v498
        %v501 = vadd.f32 %v492, %v498
        %502 = vst [vmem:[%s272] sm:$0xff] %v500
        %503 = vst [vmem:[%s272 + $0x8] sm:$0xff] %v501
        %s504 = sand.u32 %s141, 1
        %s505 = scalar_lea.sflag [#allocation4], %s504
        %s506 = sand.u32 %s141, 1
        %s507 = smul.addr %s506, 16
        %s508 = scalar_lea.vmem [#allocation8], %s507
        // Predicated region
        $region53: #{tpu_custom_call.1} parent=39 // pred_check
          %p509 = pneg %p151
        $region54: #{tpu_custom_call.1} parent=39 // pred_check_branch
          %511 = sbr.rel (%p509) target = $region56
        $region55: #{tpu_custom_call.1} parent=39 // pred_region
          %s512 = smul.u32 2, %s23
          %s514 = ssub.s32 256, 256
          %515 = vsyncadd %s505, %s514
          %s516 = smul.addr %s512, 128
          %s517 = scalar_lea.hbm %s5, %s516
          %s518 = sshll.u32 %s508, 4
          %s519 = int_to_ptr.vmem [resolvable:$true] %s518
          %524 = dma.vmem_to_hbm [thread:$0]  %s519, 256, %s517, %s505, 128, 128, 8
        $region56: #{tpu_custom_call.1} parent=39 // pred_fallthru
          _
      $region40: #{tpu_custom_call.1} parent=5 // pred_fallthru
        _
      %p525 = scmp.le.s32.totalorder 2, %s18
      // Predicated region
      $region57: #{tpu_custom_call.1} parent=5 // pred_check
        %p526 = pneg %p525
      $region58: #{tpu_custom_call.1} parent=5 // pred_check_branch
        %528 = sbr.rel (%p526) target = $region60
      $region59: #{tpu_custom_call.1} parent=5 // pred_region
        %s529 = ssub.s32 %s18, 2
        // Predicated region
        $region61: #{tpu_custom_call.1} parent=59 // pred_check
          %p530 = pneg %p157
        $region62: #{tpu_custom_call.1} parent=59 // pred_check_branch
          %532 = sbr.rel (%p530) target = $region64
        $region63: #{tpu_custom_call.1} parent=59 // pred_region
          %s533 = sand.u32 %s142, 1
          %s534 = scalar_lea.sflag [#allocation4], %s533
          %s535 = sand.u32 %s142, 1
          %s536 = smul.addr %s535, 16
          %s537 = scalar_lea.vmem [#allocation8], %s536
          %538 = dma.done %s534, 256
        $region64: #{tpu_custom_call.1} parent=59 // pred_fallthru
          _
      $region60: #{tpu_custom_call.1} parent=5 // pred_fallthru
        _
    $region6: #{tpu_custom_call.1} parent=1 // loop_footer
      %s22 = sadd.s32 1, %s18
    $region7: #{tpu_custom_call.1} parent=1 // loop_footer_branch
      %17 = sbr.rel target = $region3
    $region8: #{tpu_custom_call.1} parent=1 // loop_exit
      _
    %539 = vsyncpa [#allocation3], 1
    %s540 = scalar_lea.sflag [#allocation3], 1
    %541 = vsyncpa %s540, 1
    %542 = vsyncpa [#allocation6], 1
    %543 = vsyncpa [#allocation4], 1
    %s544 = scalar_lea.sflag [#allocation4], 1
    %545 = vsyncpa %s544, 1

</llo_original>
